<compile_context>
chip_gen: v7x
topology: tpu7x:2x2x1
jax: 0.10.0
libtpu: 0.0.40
codegen_flags: <defaults>
</compile_context>

<pallas_src>
import jax
import jax.numpy as jnp
from jax import lax
from jax.experimental import pallas as pl
from jax.experimental.pallas import tpu as pltpu

NEG_SLOPE = 0.01   # nn.LeakyReLU default negative_slope
HIDDEN = 128       # fc_head1 output width (fixed by the module)


def _leaky_relu(x):
    return jnp.where(x >= 0, x, NEG_SLOPE * x)


def _head_kernel(x_ref, w1_ref, b1_ref, w2_ref, b2_ref, o_ref):
    # x_ref:  (TM, E)   activation tile (bf16 when caller passes f32)
    # w1_ref: (E, 128)  layer-1 weight (same dtype as x tile -> native MXU)
    # b1_ref: (1, 128)  layer-1 bias   (f32)
    # w2_ref: (1, 128)  layer-2 weight as a row (f32)
    # b2_ref: (1, 1)    layer-2 bias   (f32)
    # o_ref:  (1, TM)   lane-dense output tile
    # Layer 1: MXU matmul with f32 accumulation.
    h = jnp.dot(x_ref[...], w1_ref[...], preferred_element_type=jnp.float32)
    h = _leaky_relu(h + b1_ref[...])                          # (TM, 128) f32
    # Layer 2: contract the hidden axis of h against the (1, 128) weight row.
    # This emits a (1, TM) lane-major result directly, so the store is dense
    # (no (TM, 1) column of masked stores / strided writeback).  It is one
    # tiny extra MXU op; the kernel is HBM-bound so the MXU has plenty of
    # slack.
    y = lax.dot_general(w2_ref[...], h,
                        dimension_numbers=(((1,), (1,)), ((), ())),
                        preferred_element_type=jnp.float32)   # (1, TM)
    y = _leaky_relu(y + b2_ref[...])
    o_ref[...] = y.astype(o_ref.dtype)


def _round_up(a, b):
    return (a + b - 1) // b * b


def _cdiv(a, b):
    return (a + b - 1) // b


def _choose_tile_rows(M, E, itemsize):
    """Rows per activation tile.

    Targets ~12 MiB activation tiles (double-buffered by the BlockSpec
    pipeline), caps the f32 (tm, 128) hidden intermediate at ~8 MiB, keeps tm
    a multiple of 128 (512 when possible), never exceeds M, and guarantees at
    least two row tiles when M > 128 so both TensorCores get work on v7x.
    """
    if M <= 128:
        return max(M, 1)                      # single block = full array dims
    row_bytes = max(E * itemsize, 1)
    tm = (12 * 1024 * 1024) // row_bytes      # ~12 MiB activation tile
    tm = min(tm, 16384)                       # keep f32 hidden <= 8 MiB
    if tm >= 512:
        tm = (tm // 512) * 512
    else:
        tm = max(128, (tm // 128) * 128)
    tm = min(tm, _round_up(M, 128))
    if _cdiv(M, tm) < 2:                      # v7x megacore: >= 2 row tiles
        tm = max(128, _round_up(_cdiv(M, 2), 128))
    return tm


def bitrate_regression_head(x, w1, b1, w2, b2):
    """x: (..., E). Returns (..., 1) with the same leading dims and x's dtype."""
    orig_shape = x.shape
    E = orig_shape[-1]
    out_dtype = x.dtype

    # Stream activations/weights as bf16 when the caller passes f32; the
    # matmul still accumulates in f32.  Under an outer jit this convert fuses
    # into the producer of x (the PLM output), halving streamed HBM bytes.
    stream_dtype = jnp.bfloat16 if x.dtype == jnp.float32 else x.dtype
    x2d = x.reshape(-1, E).astype(stream_dtype)
    M = x2d.shape[0]

    tm = _choose_tile_rows(M, E, jnp.dtype(stream_dtype).itemsize)
    n_tiles = _cdiv(M, tm)
    total_rows = n_tiles * tm
    grid = (n_tiles,)

    w1c = jnp.asarray(w1).astype(stream_dtype)               # (E, 128)
    b1r = jnp.asarray(b1, jnp.float32).reshape(1, HIDDEN)    # (1, 128)
    w2r = jnp.asarray(w2, jnp.float32).reshape(1, HIDDEN)    # (128,1) -> row
    b2r = jnp.asarray(b2, jnp.float32).reshape(1, 1)         # (1, 1)

    cost = pl.CostEstimate(
        flops=2 * total_rows * E * HIDDEN + 2 * total_rows * HIDDEN,
        transcendentals=0,
        bytes_accessed=(total_rows * E * x2d.dtype.itemsize
                        + E * HIDDEN * w1c.dtype.itemsize
                        + (2 * HIDDEN + 1) * 4
                        + total_rows * jnp.dtype(out_dtype).itemsize),
    )

    out = pl.pallas_call(
        _head_kernel,
        out_shape=jax.ShapeDtypeStruct((1, total_rows), out_dtype),
        grid_spec=pltpu.PrefetchScalarGridSpec(
            num_scalar_prefetch=0,
            grid=grid,
            in_specs=[
                pl.BlockSpec((tm, E), lambda i: (i, 0)),      # streamed activations
                pl.BlockSpec((E, HIDDEN), lambda i: (0, 0)),  # VMEM-resident weights
                pl.BlockSpec((1, HIDDEN), lambda i: (0, 0)),
                pl.BlockSpec((1, HIDDEN), lambda i: (0, 0)),
                pl.BlockSpec((1, 1), lambda i: (0, 0)),
            ],
            out_specs=pl.BlockSpec((1, tm), lambda i: (0, i)),  # lane-dense output
        ),
        compiler_params=pltpu.CompilerParams(
            dimension_semantics=("parallel",),        # row tiles shard across TCs (v7x)
            vmem_limit_bytes=48 * 1024 * 1024,        # < v7x 64 MiB/TC; > v5e 16 MiB default
        ),
        cost_estimate=cost,
    )(x2d, w1c, b1r, w2r, b2r)

    out = out.reshape(-1)[:M]                 # drop garbage rows of ragged last block
    return out.reshape(*orig_shape[:-1], 1)


def init_params(key, plm_embed_size, hidden=HIDDEN):
    """Deterministic init matching nn.Linear shapes (stored transposed: (in, out))."""
    k1, k2, k3, k4 = jax.random.split(key, 4)
    bound1 = 1.0 / (plm_embed_size ** 0.5)
    bound2 = 1.0 / (hidden ** 0.5)
    w1 = jax.random.uniform(k1, (plm_embed_size, hidden), jnp.float32, -bound1, bound1)
    b1 = jax.random.uniform(k2, (hidden,), jnp.float32, -bound1, bound1)
    w2 = jax.random.uniform(k3, (hidden, 1), jnp.float32, -bound2, bound2)
    b2 = jax.random.uniform(k4, (1,), jnp.float32, -bound2, bound2)
    return w1, b1, w2, b2


if __name__ == "__main__":
    key = jax.random.PRNGKey(0)
    kx, kp = jax.random.split(key)

    batch, seq, plm_embed_size = 2, 8, 32
    x = jax.random.normal(kx, (batch, seq, plm_embed_size), jnp.float32)
    w1, b1, w2, b2 = init_params(kp, plm_embed_size)

    out = bitrate_regression_head(x, w1, b1, w2, b2)
    out = jax.block_until_ready(out)
    assert out.shape == (batch, seq, 1)

    # Reference matching the kernel's bf16-stream / f32-accumulate math.
    xb = x.reshape(-1, plm_embed_size).astype(jnp.bfloat16)
    h_ref = jnp.dot(xb, w1.astype(jnp.bfloat16),
                    preferred_element_type=jnp.float32) + b1
    h_ref = jnp.where(h_ref >= 0, h_ref, NEG_SLOPE * h_ref)
    y_ref = jnp.sum(h_ref * w2.reshape(1, -1), axis=-1, keepdims=True) + b2
    y_ref = jnp.where(y_ref >= 0, y_ref, NEG_SLOPE * y_ref)
    y_ref = y_ref.reshape(batch, seq, 1)
    err = float(jnp.max(jnp.abs(out - y_ref)))
    assert jnp.allclose(out, y_ref, atol=5e-3, rtol=5e-3), err

    # Loose sanity check against the full-f32 module semantics.
    h32 = x @ w1 + b1
    h32 = jnp.where(h32 >= 0, h32, NEG_SLOPE * h32)
    y32 = h32 @ w2 + b2
    y32 = jnp.where(y32 >= 0, y32, NEG_SLOPE * y32)
    assert jnp.allclose(out, y32, atol=1e-1, rtol=1e-1)

    print("KERNEL_OK")
</pallas_src>

<mosaic_0001>
module attributes {stable_mosaic.version = 11 : i64} {
  func.func @_head_kernel(%arg0: i32, %arg1: memref<16x32xbf16, #tpu.memory_space<vmem>>, %arg2: memref<32x128xbf16, #tpu.memory_space<vmem>>, %arg3: memref<1x128xf32, #tpu.memory_space<vmem>>, %arg4: memref<1x128xf32, #tpu.memory_space<vmem>>, %arg5: memref<1x1xf32, #tpu.memory_space<vmem>>, %arg6: memref<1x16xf32, #tpu.memory_space<vmem>>) attributes {dimension_semantics = [#tpu.dimension_semantics<parallel>], iteration_bounds = array<i64: 1>, scalar_prefetch = 0 : i64, scratch_operands = 0 : i64, tpu.core_type = #tpu.core_type<tc>, window_params = [{transform_indices = @transform_0, window_bounds = array<i64: 16, 32>}, {pipeline_mode = #tpu.pipeline_mode<synchronous>, transform_indices = @transform_1, window_bounds = array<i64: 32, 128>}, {pipeline_mode = #tpu.pipeline_mode<synchronous>, transform_indices = @transform_2, window_bounds = array<i64: 1, 128>}, {pipeline_mode = #tpu.pipeline_mode<synchronous>, transform_indices = @transform_3, window_bounds = array<i64: 1, 128>}, {pipeline_mode = #tpu.pipeline_mode<synchronous>, transform_indices = @transform_4, window_bounds = array<i64: 1, 1>}, {transform_indices = @transform_5, window_bounds = array<i64: 1, 16>}]} {
    %c0 = arith.constant 0 : index
    %c0_0 = arith.constant 0 : index
    %0 = vector.load %arg1[%c0, %c0_0] : memref<16x32xbf16, #tpu.memory_space<vmem>>, vector<16x32xbf16>
    %c0_1 = arith.constant 0 : index
    %c0_2 = arith.constant 0 : index
    %1 = vector.load %arg2[%c0_1, %c0_2] : memref<32x128xbf16, #tpu.memory_space<vmem>>, vector<32x128xbf16>
    %cst = arith.constant dense<0.000000e+00> : vector<16x128xf32>
    %2 = tpu.matmul %0, %1, %cst {dimension_numbers = #tpu.dot_dimension_numbers<[1], [0], [0], [1], [0, 0, 1, 1], [], []>} : vector<16x32xbf16>, vector<32x128xbf16>, vector<16x128xf32> -> vector<16x128xf32>
    %c0_3 = arith.constant 0 : index
    %c0_4 = arith.constant 0 : index
    %3 = vector.load %arg3[%c0_3, %c0_4] : memref<1x128xf32, #tpu.memory_space<vmem>>, vector<1x128xf32>
    %4 = vector.broadcast %3 : vector<1x128xf32> to vector<16x128xf32>
    %5 = arith.addf %2, %4 : vector<16x128xf32>
    %cst_5 = arith.constant 0.000000e+00 : f32
    %6 = vector.broadcast %cst_5 : f32 to vector<16x128xf32>
    %7 = arith.cmpf oge, %5, %6 : vector<16x128xf32>
    %cst_6 = arith.constant 0.00999999977 : f32
    %8 = vector.broadcast %cst_6 : f32 to vector<16x128xf32>
    %9 = arith.mulf %8, %5 : vector<16x128xf32>
    %10 = arith.select %7, %5, %9 : vector<16x128xi1>, vector<16x128xf32>
    %c0_7 = arith.constant 0 : index
    %c0_8 = arith.constant 0 : index
    %11 = vector.load %arg4[%c0_7, %c0_8] : memref<1x128xf32, #tpu.memory_space<vmem>>, vector<1x128xf32>
    %cst_9 = arith.constant dense<0.000000e+00> : vector<1x16xf32>
    %12 = tpu.matmul %11, %10, %cst_9 {dimension_numbers = #tpu.dot_dimension_numbers<[1], [1], [0], [0], [0, 0, 1, 0], [], []>} : vector<1x128xf32>, vector<16x128xf32>, vector<1x16xf32> -> vector<1x16xf32>
    %c0_10 = arith.constant 0 : index
    %c0_11 = arith.constant 0 : index
    %13 = vector.load %arg5[%c0_10, %c0_11] : memref<1x1xf32, #tpu.memory_space<vmem>>, vector<1x1xf32>
    %14 = vector.broadcast %13 : vector<1x1xf32> to vector<1x16xf32>
    %15 = arith.addf %12, %14 : vector<1x16xf32>
    %cst_12 = arith.constant 0.000000e+00 : f32
    %16 = vector.broadcast %cst_12 : f32 to vector<1x16xf32>
    %17 = arith.cmpf oge, %15, %16 : vector<1x16xf32>
    %cst_13 = arith.constant 0.00999999977 : f32
    %18 = vector.broadcast %cst_13 : f32 to vector<1x16xf32>
    %19 = arith.mulf %18, %15 : vector<1x16xf32>
    %20 = arith.select %17, %15, %19 : vector<1x16xi1>, vector<1x16xf32>
    %c0_14 = arith.constant 0 : index
    %c0_15 = arith.constant 0 : index
    %21 = vector.load %arg6[%c0_14, %c0_15] : memref<1x16xf32, #tpu.memory_space<vmem>>, vector<1x16xf32>
    tpu.vector_store %arg6[%c0_14, %c0_15], %20 {strides = array<i32>} : memref<1x16xf32, #tpu.memory_space<vmem>>, vector<1x16xf32>,
    return
  }
  func.func @transform_0(%arg0: i32) -> (i32, i32) {
    %c0_i32 = arith.constant 0 : i32
    %c0_i32_0 = arith.constant 0 : i32
    return %arg0, %c0_i32 : i32, i32
  }
  func.func @transform_1(%arg0: i32) -> (i32, i32) {
    %c0_i32 = arith.constant 0 : i32
    %c0_i32_0 = arith.constant 0 : i32
    %c0_i32_1 = arith.constant 0 : i32
    return %c0_i32, %c0_i32_0 : i32, i32
  }
  func.func @transform_2(%arg0: i32) -> (i32, i32) {
    %c0_i32 = arith.constant 0 : i32
    %c0_i32_0 = arith.constant 0 : i32
    %c0_i32_1 = arith.constant 0 : i32
    return %c0_i32, %c0_i32_0 : i32, i32
  }
  func.func @transform_3(%arg0: i32) -> (i32, i32) {
    %c0_i32 = arith.constant 0 : i32
    %c0_i32_0 = arith.constant 0 : i32
    %c0_i32_1 = arith.constant 0 : i32
    return %c0_i32, %c0_i32_0 : i32, i32
  }
  func.func @transform_4(%arg0: i32) -> (i32, i32) {
    %c0_i32 = arith.constant 0 : i32
    %c0_i32_0 = arith.constant 0 : i32
    %c0_i32_1 = arith.constant 0 : i32
    return %c0_i32, %c0_i32_0 : i32, i32
  }
  func.func @transform_5(%arg0: i32) -> (i32, i32) {
    %c0_i32 = arith.constant 0 : i32
    %c0_i32_0 = arith.constant 0 : i32
    return %c0_i32, %arg0 : i32, i32
  }
}

</mosaic_0001>

<llo_original>
// kernel: tpu_custom_call.1
$region0: #{tpu_custom_call.1}
  #allocation0 [shape = 'u32[]', space=smem, size = 0x4, offset = 0x4, fixed_abs, tag = 'smem constant byte address 0x4 - core index']
  #allocation1 [shape = 'u32[144,128]{1,0:T(1,128)}', space=vmem, size = 0x12000, scoped, tag = 'internal scratch']
  #allocation2 [shape = 'f32[1,1]{1,0:T(1,128)S(1)}', space=vmem, size = 0x200, scoped, tag = 'scoped memory for tpu_custom_call.1']
  %s0 = inlined_call_operand.hbm [shape: bf16[16,32], index: 0, kind: input, shape index: {}]
  %s1 = inlined_call_operand.hbm [shape: bf16[32,128], index: 1, kind: input, shape index: {}]
  %s2 = inlined_call_operand.vmem [shape: f32[1,128], index: 2, kind: input, shape index: {}]
  %s3 = inlined_call_operand.vmem [shape: f32[1,128], index: 3, kind: input, shape index: {}]
  %s4 = inlined_call_operand.<no memory space> [shape: f32[1,1], index: 4, kind: input, shape index: {}]
  %s5 = inlined_call_operand.hbm [shape: f32[1,16], index: 5, kind: output, shape index: {}]
  %s6 = sld [smem:[#allocation0]]
  $region38: #{tpu_custom_call.1} parent=0
    _
  %s8 = ssub.s32 1, %s6
  %s9 = scalar_select 0, %s8, %s6
  %v10 = vstv %s4
  %11 = vst [vmem:[#allocation2] sm:$0x1] %v10
  $region1: #{tpu_custom_call.1} parent=0
    #allocation3 [shape = 'u8[4096]{0}', space=vmem, size = 0x1000, scoped, tag = 'input window, operand 0, single buffered']
    #allocation4 [shape = 's32[1]{0}', space=sflag, size = 0x4, scoped, tag = 'scoped memory for tpu_custom_call.1']
    #allocation5 [shape = 's32[1]{0}', space=sflag, size = 0x4, scoped, tag = 'scoped memory for tpu_custom_call.1']
    #allocation6 [shape = 'u8[8192]{0}', space=vmem, size = 0x2000, scoped, tag = 'input window, operand 1, single buffered']
    #allocation7 [shape = 's32[1]{0}', space=sflag, size = 0x4, scoped, tag = 'scoped memory for tpu_custom_call.1']
    #allocation8 [shape = 'u8[512]{0}', space=vmem, size = 0x400, scoped, tag = 'output window, operand 0, single buffered']
    %12 = vsyncpa [#allocation4], 0
    %13 = vsyncpa [#allocation7], 0
    %14 = vsyncpa [#allocation5], 0
    // Predicated region
    $region2: #{tpu_custom_call.1} parent=1 // pred_check
      _
    $region3: #{tpu_custom_call.1} parent=1 // pred_check_branch
      %16 = sbr.rel (0) target = $region5
    $region4: #{tpu_custom_call.1} parent=1 // pred_region
      %s18 = ssub.s32 128, 128
      %19 = vsyncadd [#allocation4], %s18
      %s20 = sshll.u32 [#allocation3], 4
      %s21 = int_to_ptr.vmem [resolvable:$true] %s20
      %26 = dma.hbm_to_vmem [thread:$0]  %s0, 128, %s21, [#allocation4], 64, 64, 4
    $region5: #{tpu_custom_call.1} parent=1 // pred_fallthru
      _
    // Predicated region
    $region6: #{tpu_custom_call.1} parent=1 // pred_check
      _
    $region7: #{tpu_custom_call.1} parent=1 // pred_check_branch
      %28 = sbr.rel (0) target = $region9
    $region8: #{tpu_custom_call.1} parent=1 // pred_region
      %s30 = ssub.s32 256, 256
      %31 = vsyncadd [#allocation7], %s30
      %s32 = sshll.u32 [#allocation6], 4
      %s33 = int_to_ptr.vmem [resolvable:$true] %s32
      %38 = dma.hbm_to_vmem [thread:$0]  %s1, 256, %s33, [#allocation7], 64, 64, 4
    $region9: #{tpu_custom_call.1} parent=1 // pred_fallthru
      _
    // Predicated region
    $region10: #{tpu_custom_call.1} parent=1 // pred_check
      _
    $region11: #{tpu_custom_call.1} parent=1 // pred_check_branch
      %40 = sbr.rel (0) target = $region13
    $region12: #{tpu_custom_call.1} parent=1 // pred_region
      _
    $region13: #{tpu_custom_call.1} parent=1 // pred_fallthru
      _
    // Predicated region
    $region14: #{tpu_custom_call.1} parent=1 // pred_check
      _
    $region15: #{tpu_custom_call.1} parent=1 // pred_check_branch
      %42 = sbr.rel (0) target = $region17
    $region16: #{tpu_custom_call.1} parent=1 // pred_region
      _
    $region17: #{tpu_custom_call.1} parent=1 // pred_fallthru
      _
    // Predicated region
    $region18: #{tpu_custom_call.1} parent=1 // pred_check
      _
    $region19: #{tpu_custom_call.1} parent=1 // pred_check_branch
      %44 = sbr.rel (0) target = $region21
    $region20: #{tpu_custom_call.1} parent=1 // pred_region
      _
    $region21: #{tpu_custom_call.1} parent=1 // pred_fallthru
      _
    // Predicated region
    $region22: #{tpu_custom_call.1} parent=1 // pred_check
      _
    $region23: #{tpu_custom_call.1} parent=1 // pred_check_branch
      %46 = sbr.rel (0) target = $region25
    $region24: #{tpu_custom_call.1} parent=1 // pred_region
      %47 = dma.done [#allocation4], 128
    $region25: #{tpu_custom_call.1} parent=1 // pred_fallthru
      _
    // Predicated region
    $region26: #{tpu_custom_call.1} parent=1 // pred_check
      _
    $region27: #{tpu_custom_call.1} parent=1 // pred_check_branch
      %49 = sbr.rel (0) target = $region29
    $region28: #{tpu_custom_call.1} parent=1 // pred_region
      %50 = dma.done [#allocation7], 256
    $region29: #{tpu_custom_call.1} parent=1 // pred_fallthru
      _
    %v52 = vld [vmem:[#allocation3] sm:$0xf]
    %v53 = vld [vmem:[#allocation3 + $0x4] sm:$0xf]
    %v54 = vld [vmem:[#allocation6] sm:$0xf]
    %v55 = vld [vmem:[#allocation6 + $0x4] sm:$0xf]
    %v56 = vld [vmem:[#allocation6 + $0x8] sm:$0xf]
    %v57 = vld [vmem:[#allocation6 + $0xc] sm:$0xf]
    %v58 = vld [vmem:[%s2] sm:$0x1]
    %v60 = vlaneseq
    %v61 = vshrl.u32 %v60, 7
    %v62 = vsub.s32 0, %v61
    %v63 = vrot.slane %v58, %v62
    %v67 = vunpack.c.l.b16 %v52
    %v68 = vunpack.c.l.b16 %v53
    %v69 = vpack.c.b16 %v68, %v67
    %v74 = vunpack.c.l.b16 %v54
    %v75 = vunpack.c.l.b16 %v55
    %v76 = vunpack.c.l.b16 %v56
    %v77 = vunpack.c.l.b16 %v57
    %v78 = vpack.c.b16 %v75, %v74
    %v79 = vpack.c.b16 %v77, %v76
    %vm82 = vcmask 261120
    %v84 = vsel %vm82, %v69, 0
    %86 = vmatprep.subr.bf16.mxu0 0
    %87 = vmatpush1.bf16.msra.mxu0 %v78
    %88 = vmatprep.subr.bf16.mxu0 0
    %89 = vmatpush1.bf16.msra.mxu0 %v79
    %90 = vmatprep.subr.bf16.mxu0 0
    %91 = vmatpush1.bf16.msra.mxu0 0
    %92 = vmatprep.subr.bf16.mxu0 0
    %93 = vmatpush1.bf16.msra.mxu0 0
    %94 = vmatprep.subr.bf16.mxu0 0
    %95 = vmatpush1.bf16.msra.mxu0 0
    %96 = vmatprep.subr.bf16.mxu0 0
    %97 = vmatpush1.bf16.msra.mxu0 0
    %98 = vmatprep.subr.bf16.mxu0 0
    %99 = vmatpush1.bf16.msra.mxu0 0
    %100 = vmatprep.subr.bf16.mxu0 0
    %101 = vmatpush1.bf16.msra.mxu0 0
    %102 = vmatprep.subr.bf16.mxu0 0
    %103 = vmatpush1.bf16.msra.mxu0 0
    %104 = vmatprep.subr.bf16.mxu0 0
    %105 = vmatpush1.bf16.msra.mxu0 0
    %106 = vmatprep.subr.bf16.mxu0 0
    %107 = vmatpush1.bf16.msra.mxu0 0
    %108 = vmatprep.subr.bf16.mxu0 0
    %109 = vmatpush1.bf16.msra.mxu0 0
    %110 = vmatprep.subr.bf16.mxu0 0
    %111 = vmatpush1.bf16.msra.mxu0 0
    %112 = vmatprep.subr.bf16.mxu0 0
    %113 = vmatpush1.bf16.msra.mxu0 0
    %114 = vmatprep.subr.bf16.mxu0 0
    %115 = vmatpush1.bf16.msra.mxu0 0
    %116 = vmatprep.subr.bf16.mxu0 0
    %117 = vmatpush1.bf16.msra.mxu0 0
    %118 = vmatprep.mubr.bf16.mxu0 0
    %119 = vmatmul.mubr.bf16.gmra.mrb[0].mxu0 %v84
    %v120 = vpop.f32.mrb[0].mxu0
    %v121 = vadd.f32 %v63, %v120
    %v122 = vpop.f32.mrb[0].mxu0
    %v123 = vpop.f32.mrb[0].mxu0
    %v124 = vadd.f32 %v63, %v123
    %v125 = vpop.f32.mrb[0].mxu0
    %126 = vdwg.mxu0
    %vm127 = vcmp.ge.f32.partialorder %v121, 0.0
    %vm128 = vcmp.ge.f32.partialorder %v124, 0.0
    %v129 = vmul.f32 %v121, 0.01
    %v130 = vmul.f32 %v124, 0.01
    %v131 = vsel %vm127, %v121, %v129
    %v132 = vsel %vm128, %v124, %v130
    %v133 = vld [vmem:[%s3] sm:$0x1]
    %v134 = vld [vmem:[#allocation2] sm:$0x1]
    %136 = vset.pattern.permute.xlu0 0
    %137 = vperm.xlu0 %136, %v134
    %v138 = vpop.permute.xlu0 %137
    %v140 = vlaneseq
    %v141 = vshrl.u32 %v140, 7
    %v142 = vsub.s32 0, %v141
    %v143 = vrot.slane %v138, %v142
    %144 = vmatprep.subr.mxu0 0.0
    %145 = vmatpush1.xpose.msra.mxu0 %v131
    %146 = vmatprep.subr.mxu0 0.0
    %147 = vmatpush1.xpose.msra.mxu0 %v132
    %148 = vmatprep.subr.mxu0 0.0
    %149 = vmatpush1.xpose.msra.mxu0 0.0
    %150 = vmatprep.subr.mxu0 0.0
    %151 = vmatpush1.xpose.msra.mxu0 0.0
    %152 = vmatprep.subr.mxu0 0.0
    %153 = vmatpush1.xpose.msra.mxu0 0.0
    %154 = vmatprep.subr.mxu0 0.0
    %155 = vmatpush1.xpose.msra.mxu0 0.0
    %156 = vmatprep.subr.mxu0 0.0
    %157 = vmatpush1.xpose.msra.mxu0 0.0
    %158 = vmatprep.subr.mxu0 0.0
    %159 = vmatpush1.xpose.msra.mxu0 0.0
    %160 = vmatprep.subr.mxu0 0.0
    %161 = vmatpush1.xpose.msra.mxu0 0.0
    %162 = vmatprep.subr.mxu0 0.0
    %163 = vmatpush1.xpose.msra.mxu0 0.0
    %164 = vmatprep.subr.mxu0 0.0
    %165 = vmatpush1.xpose.msra.mxu0 0.0
    %166 = vmatprep.subr.mxu0 0.0
    %167 = vmatpush1.xpose.msra.mxu0 0.0
    %168 = vmatprep.subr.mxu0 0.0
    %169 = vmatpush1.xpose.msra.mxu0 0.0
    %170 = vmatprep.subr.mxu0 0.0
    %171 = vmatpush1.xpose.msra.mxu0 0.0
    %172 = vmatprep.subr.mxu0 0.0
    %173 = vmatpush1.xpose.msra.mxu0 0.0
    %174 = vmatprep.subr.mxu0 0.0
    %175 = vmatpush1.xpose.msra.mxu0 0.0
    %176 = vmatprep.subr.mxu0 0.0
    %177 = vmatpush1.xpose.msra.mxu0 0.0
    %178 = vmatprep.subr.mxu0 0.0
    %179 = vmatpush1.xpose.msra.mxu0 0.0
    %180 = vmatprep.subr.mxu0 0.0
    %181 = vmatpush1.xpose.msra.mxu0 0.0
    %182 = vmatprep.subr.mxu0 0.0
    %183 = vmatpush1.xpose.msra.mxu0 0.0
    %184 = vmatprep.subr.mxu0 0.0
    %185 = vmatpush1.xpose.msra.mxu0 0.0
    %186 = vmatprep.subr.mxu0 0.0
    %187 = vmatpush1.xpose.msra.mxu0 0.0
    %188 = vmatprep.subr.mxu0 0.0
    %189 = vmatpush1.xpose.msra.mxu0 0.0
    %190 = vmatprep.subr.mxu0 0.0
    %191 = vmatpush1.xpose.msra.mxu0 0.0
    %192 = vmatprep.subr.mxu0 0.0
    %193 = vmatpush1.xpose.msra.mxu0 0.0
    %194 = vmatprep.subr.mxu0 0.0
    %195 = vmatpush1.xpose.msra.mxu0 0.0
    %196 = vmatprep.subr.mxu0 0.0
    %197 = vmatpush1.xpose.msra.mxu0 0.0
    %198 = vmatprep.subr.mxu0 0.0
    %199 = vmatpush1.xpose.msra.mxu0 0.0
    %200 = vmatprep.subr.mxu0 0.0
    %201 = vmatpush1.xpose.msra.mxu0 0.0
    %202 = vmatprep.subr.mxu0 0.0
    %203 = vmatpush1.xpose.msra.mxu0 0.0
    %204 = vmatprep.subr.mxu0 0.0
    %205 = vmatpush1.xpose.msra.mxu0 0.0
    %206 = vmatprep.subr.mxu0 0.0
    %207 = vmatpush1.xpose.msra.mxu0 0.0
    %208 = vmatprep.mubr.f32.mxu0 0.0
    %209 = vmatmul.mubr.f32.gmra.mrb[0].mxu0 %v133
    %v210 = vpop.f32.mrb[0].mxu0
    %v211 = vadd.f32 %v143, %v210
    %v212 = vpop.f32.mrb[0].mxu0
    %213 = vdwg.mxu0
    %vm214 = vcmp.ge.f32.partialorder %v211, 0.0
    %v215 = vmul.f32 %v211, 0.01
    %v216 = vsel %vm214, %v211, %v215
    %vm217 = vcmask 122880
    %218 = vst.msk [vmem:[#allocation8] sm:$0x1] %vm217, %v216
    // Predicated region
    $region30: #{tpu_custom_call.1} parent=1 // pred_check
      _
    $region31: #{tpu_custom_call.1} parent=1 // pred_check_branch
      %220 = sbr.rel (0) target = $region33
    $region32: #{tpu_custom_call.1} parent=1 // pred_region
      %s222 = ssub.s32 16, 16
      %223 = vsyncadd [#allocation5], %s222
      %s225 = sshll.u32 [#allocation8], 4
      %s226 = int_to_ptr.vmem [resolvable:$true] %s225
      %228 = dma.vmem_to_hbm [thread:$0]  %s226, 16, %s5, [#allocation5]
    $region33: #{tpu_custom_call.1} parent=1 // pred_fallthru
      _
    // Predicated region
    $region34: #{tpu_custom_call.1} parent=1 // pred_check
      _
    $region35: #{tpu_custom_call.1} parent=1 // pred_check_branch
      %230 = sbr.rel (0) target = $region37
    $region36: #{tpu_custom_call.1} parent=1 // pred_region
      %231 = dma.done [#allocation5], 16
    $region37: #{tpu_custom_call.1} parent=1 // pred_fallthru
      _
    %232 = vsyncpa [#allocation4], 1
    %233 = vsyncpa [#allocation7], 1
    %234 = vsyncpa [#allocation5], 1

</llo_original>
